<compile_context>
chip_gen: v7x
topology: tpu7x:2x2x1
jax: 0.10.0
libtpu: 0.0.40
codegen_flags: <defaults>
</compile_context>

<pallas_src>
import jax
import jax.numpy as jnp
import numpy as np
from jax.experimental import pallas as pl
from jax.experimental.pallas import tpu as pltpu

K = 5          # kernel size
STRIDE = 2
PAD = 2
OUT_PAD = 1
CIN = 16
COUT = 200
NEG_SLOPE = 0.175

KC = K * K * CIN      # 400 — full contraction depth (no zero padding)
COUT_P = 256          # lane-dense padded output channels (200 -> 256)
MAX_TM = 1024         # max output-row tile


def _round_up(x, m):
    return ((x + m - 1) // m) * m


def _pick_tile(rows):
    """Row tile: as fat as useful, but keep >= 2 grid tiles when there is
    enough work so both v7x TensorCores get a share of the 'parallel' axis."""
    tm = min(MAX_TM, _round_up(rows, 8))
    if rows > 16 and pl.cdiv(rows, tm) < 2:
        tm = _round_up(pl.cdiv(rows, 2), 8)
    return tm


def _convt_leaky_kernel(x_ref, w_ref, o_ref):
    """One lane-dense GEMM per grid step + fused leaky-relu epilogue.

    x_ref: (TM, KC)       im2col rows (25 taps folded into contraction dim)
    w_ref: (KC, COUT_P)   flipped / flattened / cout-padded weights (invariant)
    o_ref: (TM, COUT_P)   output rows
    """
    y = jnp.dot(x_ref[...], w_ref[...], preferred_element_type=jnp.float32)
    o_ref[...] = jnp.maximum(y, y * NEG_SLOPE).astype(o_ref.dtype)


@jax.jit
def conv_transpose_leaky(x_nchw, weight):
    """weight: PyTorch ConvTranspose2d layout (CIN, COUT, K, K)."""
    N, cin, H, W = x_nchw.shape
    assert cin == CIN and weight.shape == (CIN, COUT, K, K)

    OH = (H - 1) * STRIDE - 2 * PAD + K + OUT_PAD
    OW = (W - 1) * STRIDE - 2 * PAD + K + OUT_PAD
    M = OH * OW
    R = N * M                       # batch folded into the GEMM row axis
    TM = _pick_tile(R)
    Rp = _round_up(R, TM)

    # ---- glue: parameter / data layout transforms (plain JAX) ----------------
    # conv_transpose == correlation of the zero-dilated input with the flipped
    # kernel:  wf[kh, kw, ci, co] = W[ci, co, K-1-kh, K-1-kw]
    wf = jnp.transpose(weight[:, :, ::-1, ::-1], (2, 3, 0, 1)).reshape(KC, COUT)
    wf = jnp.pad(wf, ((0, 0), (0, COUT_P - COUT)))                    # (400, 256)

    x = jnp.transpose(x_nchw, (0, 2, 3, 1))                           # NHWC

    # zero-dilate (stride) + output_padding (extra zero row/col bottom/right)
    Hu = (H - 1) * STRIDE + 1 + OUT_PAD
    Wu = (W - 1) * STRIDE + 1 + OUT_PAD
    xu = jnp.zeros((N, Hu, Wu, CIN), x.dtype)
    xu = xu.at[:, : (H - 1) * STRIDE + 1 : STRIDE,
               : (W - 1) * STRIDE + 1 : STRIDE, :].set(x)
    pp = K - 1 - PAD
    xp = jnp.pad(xu, ((0, 0), (pp, pp), (pp, pp), (0, 0)))            # (N,Hp,Wp,CIN)

    # im2col with the 25 taps folded into the contraction dim, ordered
    # (kh, kw, ci) to match the flattened flipped weight.
    taps = jnp.stack(
        [
            xp[:, kh:kh + OH, kw:kw + OW, :].reshape(N, M, CIN)
            for kh in range(K)
            for kw in range(K)
        ],
        axis=2,
    ).reshape(R, KC)
    taps = jnp.pad(taps, ((0, Rp - R), (0, 0)))                       # (Rp, 400)
    # TODO(synk): assemble the slab in-kernel (DMA xp per batch / 4-phase
    # decomposition) to avoid streaming the 25x-replicated operand via HBM,
    # and use bf16 inputs with f32 accumulate if tolerance can be relaxed.

    # ---- hot path: one lane-dense GEMM per row-tile + fused epilogue ---------
    flops = 2 * Rp * KC * COUT_P
    bytes_accessed = 4 * (Rp * KC + KC * COUT_P + Rp * COUT_P)

    out_flat = pl.pallas_call(
        _convt_leaky_kernel,
        out_shape=jax.ShapeDtypeStruct((Rp, COUT_P), x.dtype),
        grid=(Rp // TM,),
        in_specs=[
            pl.BlockSpec((TM, KC), lambda m: (m, 0)),
            pl.BlockSpec((KC, COUT_P), lambda m: (0, 0)),   # grid-invariant weight
        ],
        out_specs=pl.BlockSpec((TM, COUT_P), lambda m: (m, 0)),
        compiler_params=pltpu.CompilerParams(
            dimension_semantics=("parallel",),
        ),
        cost_estimate=pl.CostEstimate(
            flops=flops, transcendentals=0, bytes_accessed=bytes_accessed),
    )(taps, wf)

    out = out_flat[:R, :COUT].reshape(N, OH, OW, COUT)
    return jnp.transpose(out, (0, 3, 1, 2))                           # back to NCHW


def _reference(x_nchw, weight):
    """Pure-JAX reference (conv_general_dilated == ConvTranspose2d here)."""
    wf = jnp.transpose(weight[:, :, ::-1, ::-1], (2, 3, 0, 1))        # HWIO, flipped
    x = jnp.transpose(x_nchw, (0, 2, 3, 1))                           # NHWC
    pp = K - 1 - PAD
    y = jax.lax.conv_general_dilated(
        x, wf,
        window_strides=(1, 1),
        padding=((pp, pp + OUT_PAD), (pp, pp + OUT_PAD)),
        lhs_dilation=(STRIDE, STRIDE),
        dimension_numbers=("NHWC", "HWIO", "NHWC"),
    )
    y = jnp.where(y > 0, y, y * NEG_SLOPE)
    return jnp.transpose(y, (0, 3, 1, 2))


if __name__ == "__main__":
    key = jax.random.PRNGKey(0)
    kx, kw = jax.random.split(key)

    # small shapes consistent with the module: Cin=16 / Cout=200 fixed by __init__
    N, H, W = 2, 8, 8
    x4 = jax.random.normal(kx, (N, CIN, H, W), dtype=jnp.float32)
    # deterministic synthetic weights, PyTorch ConvTranspose2d layout (Cin,Cout,K,K)
    weight = jax.random.normal(kw, (CIN, COUT, K, K), dtype=jnp.float32) * 0.05

    out = conv_transpose_leaky(x4, weight)
    out = jax.block_until_ready(out)

    expected_shape = (N, COUT,
                      (H - 1) * STRIDE - 2 * PAD + K + OUT_PAD,
                      (W - 1) * STRIDE - 2 * PAD + K + OUT_PAD)
    assert out.shape == expected_shape, (out.shape, expected_shape)

    ref = jax.block_until_ready(_reference(x4, weight))
    np.testing.assert_allclose(np.asarray(out), np.asarray(ref), rtol=1e-4, atol=1e-4)

    print("KERNEL_OK")
</pallas_src>

<mosaic_0001>
module attributes {stable_mosaic.version = 11 : i64} {
  func.func @_convt_leaky_kernel(%arg0: i32, %arg1: memref<256x400xf32, #tpu.memory_space<vmem>>, %arg2: memref<400x256xf32, #tpu.memory_space<vmem>>, %arg3: memref<256x256xf32, #tpu.memory_space<vmem>>) attributes {dimension_semantics = [#tpu.dimension_semantics<parallel>], iteration_bounds = array<i64: 2>, scalar_prefetch = 0 : i64, scratch_operands = 0 : i64, tpu.core_type = #tpu.core_type<tc>, window_params = [{transform_indices = @transform_0, window_bounds = array<i64: 256, 400>}, {pipeline_mode = #tpu.pipeline_mode<synchronous>, transform_indices = @transform_1, window_bounds = array<i64: 400, 256>}, {transform_indices = @transform_2, window_bounds = array<i64: 256, 256>}]} {
    %c0 = arith.constant 0 : index
    %c0_0 = arith.constant 0 : index
    %0 = vector.load %arg1[%c0, %c0_0] : memref<256x400xf32, #tpu.memory_space<vmem>>, vector<256x400xf32>
    %c0_1 = arith.constant 0 : index
    %c0_2 = arith.constant 0 : index
    %1 = vector.load %arg2[%c0_1, %c0_2] : memref<400x256xf32, #tpu.memory_space<vmem>>, vector<400x256xf32>
    %cst = arith.constant dense<0.000000e+00> : vector<256x256xf32>
    %2 = tpu.matmul %0, %1, %cst {dimension_numbers = #tpu.dot_dimension_numbers<[1], [0], [0], [1], [0, 0, 1, 1], [], []>} : vector<256x400xf32>, vector<400x256xf32>, vector<256x256xf32> -> vector<256x256xf32>
    %cst_3 = arith.constant 1.750000e-01 : f32
    %3 = vector.broadcast %cst_3 : f32 to vector<256x256xf32>
    %4 = arith.mulf %2, %3 : vector<256x256xf32>
    %5 = arith.maximumf %2, %4 : vector<256x256xf32>
    %c0_4 = arith.constant 0 : index
    %c0_5 = arith.constant 0 : index
    %6 = vector.load %arg3[%c0_4, %c0_5] : memref<256x256xf32, #tpu.memory_space<vmem>>, vector<256x256xf32>
    tpu.vector_store %arg3[%c0_4, %c0_5], %5 {strides = array<i32>} : memref<256x256xf32, #tpu.memory_space<vmem>>, vector<256x256xf32>,
    return
  }
  func.func @transform_0(%arg0: i32) -> (i32, i32) {
    %c0_i32 = arith.constant 0 : i32
    %c0_i32_0 = arith.constant 0 : i32
    return %arg0, %c0_i32 : i32, i32
  }
  func.func @transform_1(%arg0: i32) -> (i32, i32) {
    %c0_i32 = arith.constant 0 : i32
    %c0_i32_0 = arith.constant 0 : i32
    %c0_i32_1 = arith.constant 0 : i32
    return %c0_i32, %c0_i32_0 : i32, i32
  }
  func.func @transform_2(%arg0: i32) -> (i32, i32) {
    %c0_i32 = arith.constant 0 : i32
    %c0_i32_0 = arith.constant 0 : i32
    return %arg0, %c0_i32 : i32, i32
  }
}

</mosaic_0001>

<llo_original>
// kernel: conv_transpose_leaky.1
$region0: #{conv_transpose_leaky.1}
  #allocation0 [shape = 'u32[]', space=smem, size = 0x4, offset = 0x4, fixed_abs, tag = 'smem constant byte address 0x4 - core index']
  #allocation1 [shape = 'u32[144,128]{1,0:T(1,128)}', space=vmem, size = 0x12000, scoped, tag = 'internal scratch']
  %s0 = inlined_call_operand.vmem [shape: f32[512,400], index: 0, kind: input, shape index: {}]
  %s1 = inlined_call_operand.vmem [shape: f32[400,256], index: 1, kind: input, shape index: {}]
  %s2 = inlined_call_operand.hbm [shape: f32[512,256], index: 2, kind: output, shape index: {}]
  %s3 = sld [smem:[#allocation0]]
  $region41: #{conv_transpose_leaky.1} parent=0
    _
  %s5 = ssub.s32 1, %s3
  %s6 = scalar_select 0, %s5, %s3
  $region1: #{conv_transpose_leaky.1} parent=0
    #allocation2 [shape = 'u8[524288]{0}', space=vmem, size = 0x80000, scoped, tag = 'output window, operand 0']
    #allocation3 [shape = 's32[2]{0}', space=sflag, size = 0x8, scoped, tag = 'scoped memory for conv_transpose_leaky.1']
    %7 = vsyncpa [#allocation3], 0
    %s8 = scalar_lea.sflag [#allocation3], 1
    %9 = vsyncpa %s8, 0
    loop: start=0, step=1, limit=4
    $region2: #{conv_transpose_leaky.1} parent=1 // loop_pre_header
      _
    $region3: #{conv_transpose_leaky.1} parent=1 // loop_header
      %s11 = sphi 0, %s15
      %p12 = scmp.ge.s32.totalorder %s11, 4
      %s21 = sphi 0, %s23
      %s24 = sphi 0, %s21
      %s25 = sphi 0, %s24
      %s41 = sphi 0, %s25
      %s45 = sphi 0, %s45
      %s47 = sphi 0, %s45
      %s48 = sphi 0, %s47
      %s62 = sphi 0, %s48
      %s68 = sphi 0, %s70
      %s71 = sphi 0, %s68
      %s72 = sphi 0, %s71
      %s88 = sphi 0, %s72
    $region4: #{conv_transpose_leaky.1} parent=1 // loop_header_branch
      %14 = sbr.rel (%p12) target = $region8
    $region5: #{conv_transpose_leaky.1} parent=1 // loop_body
      %s16 = ssub.s32 %s11, 1
      %s17 = ssub.s32 %s11, 2
      %s18 = sadd.s32 %s11, 1
      %s19 = ssub.s32 %s11, %s18
      %p20 = scmp.eq.s32.totalorder %s19, 0
      %s22 = sadd.s32 %s21, 1
      %s23 = scalar_select %p20, %s21, %s22
      %p26 = pneg %p20
      %p27 = scmp.eq.s32.totalorder %s11, 1
      %p28 = por %p26, %p27
      %p29 = scmp.ne.s32.totalorder %s21, %s24
      %p30 = scmp.eq.s32.totalorder %s11, 0
      %p31 = por %p29, %p30
      %p32 = scmp.ne.s32.totalorder %s21, %s24
      %p33 = scmp.eq.s32.totalorder %s16, 1
      %p34 = por %p32, %p33
      %p35 = scmp.ne.s32.totalorder %s24, %s25
      %p36 = scmp.eq.s32.totalorder %s16, 0
      %p37 = por %p35, %p36
      %p38 = scmp.ne.s32.totalorder %s24, %s25
      %p39 = scmp.eq.s32.totalorder %s17, 1
      %p40 = por %p38, %p39
      %p42 = scmp.ne.s32.totalorder %s25, %s41
      %p43 = scmp.eq.s32.totalorder %s17, 0
      %p44 = por %p42, %p43
      %s46 = sadd.s32 %s45, 1
      %p49 = scmp.eq.s32.totalorder %s11, 1
      %p50 = scmp.ne.s32.totalorder %s45, %s47
      %p51 = scmp.eq.s32.totalorder %s11, 0
      %p52 = por %p50, %p51
      %p53 = scmp.ne.s32.totalorder %s45, %s47
      %p54 = scmp.eq.s32.totalorder %s16, 1
      %p55 = por %p53, %p54
      %p56 = scmp.ne.s32.totalorder %s47, %s48
      %p57 = scmp.eq.s32.totalorder %s16, 0
      %p58 = por %p56, %p57
      %p59 = scmp.ne.s32.totalorder %s47, %s48
      %p60 = scmp.eq.s32.totalorder %s17, 1
      %p61 = por %p59, %p60
      %p63 = scmp.ne.s32.totalorder %s48, %s62
      %p64 = scmp.eq.s32.totalorder %s17, 0
      %p65 = por %p63, %p64
      %s66 = ssub.s32 %s11, %s18
      %p67 = scmp.eq.s32.totalorder %s66, 0
      %s69 = sadd.s32 %s68, 1
      %s70 = scalar_select %p67, %s68, %s69
      %p73 = pneg %p67
      %p74 = scmp.eq.s32.totalorder %s11, 1
      %p75 = por %p73, %p74
      %p76 = scmp.ne.s32.totalorder %s68, %s71
      %p77 = scmp.eq.s32.totalorder %s11, 0
      %p78 = por %p76, %p77
      %p79 = scmp.ne.s32.totalorder %s68, %s71
      %p80 = scmp.eq.s32.totalorder %s16, 1
      %p81 = por %p79, %p80
      %p82 = scmp.ne.s32.totalorder %s71, %s72
      %p83 = scmp.eq.s32.totalorder %s16, 0
      %p84 = por %p82, %p83
      %p85 = scmp.ne.s32.totalorder %s71, %s72
      %p86 = scmp.eq.s32.totalorder %s17, 1
      %p87 = por %p85, %p86
      %p89 = scmp.ne.s32.totalorder %s72, %s88
      %p90 = scmp.eq.s32.totalorder %s17, 0
      %p91 = por %p89, %p90
      %p92 = scmp.le.s32.totalorder 1, %s11
      %p93 = scmp.lt.s32.totalorder %s11, 3
      %p94 = pnand %p92, %p93
      %p95 = pneg %p94
      // Predicated region
      $region9: #{conv_transpose_leaky.1} parent=5 // pred_check
        _
      $region10: #{conv_transpose_leaky.1} parent=5 // pred_check_branch
        %97 = sbr.rel (%p94) target = $region12
      $region11: #{conv_transpose_leaky.1} parent=5 // pred_region
        %s98 = ssub.s32 %s11, 1
        // Predicated region
        $region13: #{conv_transpose_leaky.1} parent=11 // pred_check
          %p99 = pneg %p58
        $region14: #{conv_transpose_leaky.1} parent=11 // pred_check_branch
          %101 = sbr.rel (%p99) target = $region16
        $region15: #{conv_transpose_leaky.1} parent=11 // pred_region
          _
        $region16: #{conv_transpose_leaky.1} parent=11 // pred_fallthru
          _
      $region12: #{conv_transpose_leaky.1} parent=5 // pred_fallthru
        _
      %p102 = scmp.lt.s32.totalorder %s11, 2
      // Predicated region
      $region17: #{conv_transpose_leaky.1} parent=5 // pred_check
        %p103 = pneg %p102
      $region18: #{conv_transpose_leaky.1} parent=5 // pred_check_branch
        %105 = sbr.rel (%p103) target = $region20
      $region19: #{conv_transpose_leaky.1} parent=5 // pred_region
        // Predicated region
        $region21: #{conv_transpose_leaky.1} parent=19 // pred_check
          %p106 = pneg %p31
        $region22: #{conv_transpose_leaky.1} parent=19 // pred_check_branch
          %108 = sbr.rel (%p106) target = $region24
        $region23: #{conv_transpose_leaky.1} parent=19 // pred_region
          %s109 = smul.u32 32, %s11
          %p110 = scmp.lt.s32.totalorder %s109, 63
          %s111 = scalar_select %p110, %s109, 63
          %s112 = smul.addr %s111, 4
          %s113 = smul.addr %s112, 8
          %s114 = scalar_lea.vmem %s0, %s113
          %s115 = smul.u32 32, %s11
        $region24: #{conv_transpose_leaky.1} parent=19 // pred_fallthru
          _
      $region20: #{conv_transpose_leaky.1} parent=5 // pred_fallthru
        _
      %p116 = scmp.le.s32.totalorder 1, %s11
      %p117 = scmp.lt.s32.totalorder %s11, 3
      %p118 = pnand %p116, %p117
      %p119 = pneg %p118
      // Predicated region
      $region25: #{conv_transpose_leaky.1} parent=5 // pred_check
        _
      $region26: #{conv_transpose_leaky.1} parent=5 // pred_check_branch
        %121 = sbr.rel (%p118) target = $region28
      $region27: #{conv_transpose_leaky.1} parent=5 // pred_region
        %s122 = ssub.s32 %s11, 1
        %s123 = smul.u32 32, %s16
        %p124 = scmp.lt.s32.totalorder %s123, 63
        %s125 = scalar_select %p124, %s123, 63
        %s126 = smul.addr %s125, 4
        %s127 = smul.addr %s126, 8
        %s128 = scalar_lea.vmem %s0, %s127
        %p129 = pneg %p37
        %p130 = pneg %p34
        %p131 = pneg %p58
        %p132 = pneg %p55
        %p133 = pneg %p84
        %p134 = pneg %p81
        %s135 = sand.u32 %s71, 1
        %s136 = scalar_lea.sflag [#allocation3], %s135
        %s137 = sand.u32 %s71, 1
        %s138 = smul.addr %s137, 512
        %s139 = scalar_lea.vmem [#allocation2], %s138
        %s140 = smul.u32 32, %s16
        %p141 = scmp.lt.s32.totalorder %s140, 63
        %s142 = scalar_select %p141, %s140, 63
        %s143 = smul.addr %s142, 4
        %s144 = smul.addr %s143, 8
        %s145 = scalar_lea.vmem %s0, %s144
        %s146 = smul.u32 32, %s16
        %s147 = smul.u32 32, %s16
        %v148 = vld [vmem:[%s145] sm:$0xff]
        %v149 = vld [vmem:[%s145 + $0x8] sm:$0xff]
        %v150 = vld [vmem:[%s145 + $0x10] sm:$0xff]
        %v151 = vld [vmem:[%s145 + $0x18] sm:$0xff]
        %v152 = vld [vmem:[%s145 + $0x20] sm:$0xff]
        %v153 = vld [vmem:[%s145 + $0x28] sm:$0xff]
        %v154 = vld [vmem:[%s145 + $0x30] sm:$0xff]
        %v155 = vld [vmem:[%s145 + $0x38] sm:$0xff]
        %v156 = vld [vmem:[%s145 + $0x40] sm:$0xff]
        %v157 = vld [vmem:[%s145 + $0x48] sm:$0xff]
        %v158 = vld [vmem:[%s145 + $0x50] sm:$0xff]
        %v159 = vld [vmem:[%s145 + $0x58] sm:$0xff]
        %v160 = vld [vmem:[%s145 + $0x60] sm:$0xff]
        %v161 = vld [vmem:[%s145 + $0x68] sm:$0xff]
        %v162 = vld [vmem:[%s145 + $0x70] sm:$0xff]
        %v163 = vld [vmem:[%s145 + $0x78] sm:$0xff]
        %v164 = vld [vmem:[%s145 + $0x80] sm:$0xff]
        %v165 = vld [vmem:[%s145 + $0x88] sm:$0xff]
        %v166 = vld [vmem:[%s145 + $0x90] sm:$0xff]
        %v167 = vld [vmem:[%s145 + $0x98] sm:$0xff]
        %v168 = vld [vmem:[%s145 + $0xa0] sm:$0xff]
        %v169 = vld [vmem:[%s145 + $0xa8] sm:$0xff]
        %v170 = vld [vmem:[%s145 + $0xb0] sm:$0xff]
        %v171 = vld [vmem:[%s145 + $0xb8] sm:$0xff]
        %v172 = vld [vmem:[%s145 + $0xc0] sm:$0xff]
        %v173 = vld [vmem:[%s145 + $0xc8] sm:$0xff]
        %v174 = vld [vmem:[%s145 + $0xd0] sm:$0xff]
        %v175 = vld [vmem:[%s145 + $0xd8] sm:$0xff]
        %v176 = vld [vmem:[%s145 + $0xe0] sm:$0xff]
        %v177 = vld [vmem:[%s145 + $0xe8] sm:$0xff]
        %v178 = vld [vmem:[%s145 + $0xf0] sm:$0xff]
        %v179 = vld [vmem:[%s145 + $0xf8] sm:$0xff]
        %v180 = vld [vmem:[%s145 + $0x100] sm:$0xff]
        %v181 = vld [vmem:[%s145 + $0x108] sm:$0xff]
        %v182 = vld [vmem:[%s145 + $0x110] sm:$0xff]
        %v183 = vld [vmem:[%s145 + $0x118] sm:$0xff]
        %v184 = vld [vmem:[%s145 + $0x120] sm:$0xff]
        %v185 = vld [vmem:[%s145 + $0x128] sm:$0xff]
        %v186 = vld [vmem:[%s145 + $0x130] sm:$0xff]
        %v187 = vld [vmem:[%s145 + $0x138] sm:$0xff]
        %v188 = vld [vmem:[%s145 + $0x140] sm:$0xff]
        %v189 = vld [vmem:[%s145 + $0x148] sm:$0xff]
        %v190 = vld [vmem:[%s145 + $0x150] sm:$0xff]
        %v191 = vld [vmem:[%s145 + $0x158] sm:$0xff]
        %v192 = vld [vmem:[%s145 + $0x160] sm:$0xff]
        %v193 = vld [vmem:[%s145 + $0x168] sm:$0xff]
        %v194 = vld [vmem:[%s145 + $0x170] sm:$0xff]
        %v195 = vld [vmem:[%s145 + $0x178] sm:$0xff]
        %v196 = vld [vmem:[%s145 + $0x180] sm:$0xff]
        %v197 = vld [vmem:[%s145 + $0x188] sm:$0xff]
        %v198 = vld [vmem:[%s145 + $0x190] sm:$0xff]
        %v199 = vld [vmem:[%s145 + $0x198] sm:$0xff]
        %v200 = vld [vmem:[%s145 + $0x1a0] sm:$0xff]
        %v201 = vld [vmem:[%s145 + $0x1a8] sm:$0xff]
        %v202 = vld [vmem:[%s145 + $0x1b0] sm:$0xff]
        %v203 = vld [vmem:[%s145 + $0x1b8] sm:$0xff]
        %v204 = vld [vmem:[%s145 + $0x1c0] sm:$0xff]
        %v205 = vld [vmem:[%s145 + $0x1c8] sm:$0xff]
        %v206 = vld [vmem:[%s145 + $0x1d0] sm:$0xff]
        %v207 = vld [vmem:[%s145 + $0x1d8] sm:$0xff]
        %v208 = vld [vmem:[%s145 + $0x1e0] sm:$0xff]
        %v209 = vld [vmem:[%s145 + $0x1e8] sm:$0xff]
        %v210 = vld [vmem:[%s145 + $0x1f0] sm:$0xff]
        %v211 = vld [vmem:[%s145 + $0x1f8] sm:$0xff]
        %v212 = vld [vmem:[%s145 + $0x200] sm:$0xff]
        %v213 = vld [vmem:[%s145 + $0x208] sm:$0xff]
        %v214 = vld [vmem:[%s145 + $0x210] sm:$0xff]
        %v215 = vld [vmem:[%s145 + $0x218] sm:$0xff]
        %v216 = vld [vmem:[%s145 + $0x220] sm:$0xff]
        %v217 = vld [vmem:[%s145 + $0x228] sm:$0xff]
        %v218 = vld [vmem:[%s145 + $0x230] sm:$0xff]
        %v219 = vld [vmem:[%s145 + $0x238] sm:$0xff]
        %v220 = vld [vmem:[%s145 + $0x240] sm:$0xff]
        %v221 = vld [vmem:[%s145 + $0x248] sm:$0xff]
        %v222 = vld [vmem:[%s145 + $0x250] sm:$0xff]
        %v223 = vld [vmem:[%s145 + $0x258] sm:$0xff]
        %v224 = vld [vmem:[%s145 + $0x260] sm:$0xff]
        %v225 = vld [vmem:[%s145 + $0x268] sm:$0xff]
        %v226 = vld [vmem:[%s145 + $0x270] sm:$0xff]
        %v227 = vld [vmem:[%s145 + $0x278] sm:$0xff]
        %v228 = vld [vmem:[%s145 + $0x280] sm:$0xff]
        %v229 = vld [vmem:[%s145 + $0x288] sm:$0xff]
        %v230 = vld [vmem:[%s145 + $0x290] sm:$0xff]
        %v231 = vld [vmem:[%s145 + $0x298] sm:$0xff]
        %v232 = vld [vmem:[%s145 + $0x2a0] sm:$0xff]
        %v233 = vld [vmem:[%s145 + $0x2a8] sm:$0xff]
        %v234 = vld [vmem:[%s145 + $0x2b0] sm:$0xff]
        %v235 = vld [vmem:[%s145 + $0x2b8] sm:$0xff]
        %v236 = vld [vmem:[%s145 + $0x2c0] sm:$0xff]
        %v237 = vld [vmem:[%s145 + $0x2c8] sm:$0xff]
        %v238 = vld [vmem:[%s145 + $0x2d0] sm:$0xff]
        %v239 = vld [vmem:[%s145 + $0x2d8] sm:$0xff]
        %v240 = vld [vmem:[%s145 + $0x2e0] sm:$0xff]
        %v241 = vld [vmem:[%s145 + $0x2e8] sm:$0xff]
        %v242 = vld [vmem:[%s145 + $0x2f0] sm:$0xff]
        %v243 = vld [vmem:[%s145 + $0x2f8] sm:$0xff]
        %v244 = vld [vmem:[%s145 + $0x300] sm:$0xff]
        %v245 = vld [vmem:[%s145 + $0x308] sm:$0xff]
        %v246 = vld [vmem:[%s145 + $0x310] sm:$0xff]
        %v247 = vld [vmem:[%s145 + $0x318] sm:$0xff]
        %v248 = vld [vmem:[%s145 + $0x320] sm:$0xff]
        %v249 = vld [vmem:[%s145 + $0x328] sm:$0xff]
        %v250 = vld [vmem:[%s145 + $0x330] sm:$0xff]
        %v251 = vld [vmem:[%s145 + $0x338] sm:$0xff]
        %v252 = vld [vmem:[%s145 + $0x340] sm:$0xff]
        %v253 = vld [vmem:[%s145 + $0x348] sm:$0xff]
        %v254 = vld [vmem:[%s145 + $0x350] sm:$0xff]
        %v255 = vld [vmem:[%s145 + $0x358] sm:$0xff]
        %v256 = vld [vmem:[%s145 + $0x360] sm:$0xff]
        %v257 = vld [vmem:[%s145 + $0x368] sm:$0xff]
        %v258 = vld [vmem:[%s145 + $0x370] sm:$0xff]
        %v259 = vld [vmem:[%s145 + $0x378] sm:$0xff]
        %v260 = vld [vmem:[%s145 + $0x380] sm:$0xff]
        %v261 = vld [vmem:[%s145 + $0x388] sm:$0xff]
        %v262 = vld [vmem:[%s145 + $0x390] sm:$0xff]
        %v263 = vld [vmem:[%s145 + $0x398] sm:$0xff]
        %v264 = vld [vmem:[%s145 + $0x3a0] sm:$0xff]
        %v265 = vld [vmem:[%s145 + $0x3a8] sm:$0xff]
        %v266 = vld [vmem:[%s145 + $0x3b0] sm:$0xff]
        %v267 = vld [vmem:[%s145 + $0x3b8] sm:$0xff]
        %v268 = vld [vmem:[%s145 + $0x3c0] sm:$0xff]
        %v269 = vld [vmem:[%s145 + $0x3c8] sm:$0xff]
        %v270 = vld [vmem:[%s145 + $0x3d0] sm:$0xff]
        %v271 = vld [vmem:[%s145 + $0x3d8] sm:$0xff]
        %v272 = vld [vmem:[%s145 + $0x3e0] sm:$0xff]
        %v273 = vld [vmem:[%s145 + $0x3e8] sm:$0xff]
        %v274 = vld [vmem:[%s145 + $0x3f0] sm:$0xff]
        %v275 = vld [vmem:[%s145 + $0x3f8] sm:$0xff]
        %v276 = vld [vmem:[%s1] sm:$0xff]
        %v277 = vld [vmem:[%s1 + $0x8] sm:$0xff]
        %v278 = vld [vmem:[%s1 + $0x10] sm:$0xff]
        %v279 = vld [vmem:[%s1 + $0x18] sm:$0xff]
        %v280 = vld [vmem:[%s1 + $0x20] sm:$0xff]
        %v281 = vld [vmem:[%s1 + $0x28] sm:$0xff]
        %v282 = vld [vmem:[%s1 + $0x30] sm:$0xff]
        %v283 = vld [vmem:[%s1 + $0x38] sm:$0xff]
        %v284 = vld [vmem:[%s1 + $0x40] sm:$0xff]
        %v285 = vld [vmem:[%s1 + $0x48] sm:$0xff]
        %v286 = vld [vmem:[%s1 + $0x50] sm:$0xff]
        %v287 = vld [vmem:[%s1 + $0x58] sm:$0xff]
        %v288 = vld [vmem:[%s1 + $0x60] sm:$0xff]
        %v289 = vld [vmem:[%s1 + $0x68] sm:$0xff]
        %v290 = vld [vmem:[%s1 + $0x70] sm:$0xff]
        %v291 = vld [vmem:[%s1 + $0x78] sm:$0xff]
        %v292 = vld [vmem:[%s1 + $0x80] sm:$0xff]
        %v293 = vld [vmem:[%s1 + $0x88] sm:$0xff]
        %v294 = vld [vmem:[%s1 + $0x90] sm:$0xff]
        %v295 = vld [vmem:[%s1 + $0x98] sm:$0xff]
        %v296 = vld [vmem:[%s1 + $0xa0] sm:$0xff]
        %v297 = vld [vmem:[%s1 + $0xa8] sm:$0xff]
        %v298 = vld [vmem:[%s1 + $0xb0] sm:$0xff]
        %v299 = vld [vmem:[%s1 + $0xb8] sm:$0xff]
        %v300 = vld [vmem:[%s1 + $0xc0] sm:$0xff]
        %v301 = vld [vmem:[%s1 + $0xc8] sm:$0xff]
        %v302 = vld [vmem:[%s1 + $0xd0] sm:$0xff]
        %v303 = vld [vmem:[%s1 + $0xd8] sm:$0xff]
        %v304 = vld [vmem:[%s1 + $0xe0] sm:$0xff]
        %v305 = vld [vmem:[%s1 + $0xe8] sm:$0xff]
        %v306 = vld [vmem:[%s1 + $0xf0] sm:$0xff]
        %v307 = vld [vmem:[%s1 + $0xf8] sm:$0xff]
        %v308 = vld [vmem:[%s1 + $0x100] sm:$0xff]
        %v309 = vld [vmem:[%s1 + $0x108] sm:$0xff]
        %v310 = vld [vmem:[%s1 + $0x110] sm:$0xff]
        %v311 = vld [vmem:[%s1 + $0x118] sm:$0xff]
        %v312 = vld [vmem:[%s1 + $0x120] sm:$0xff]
        %v313 = vld [vmem:[%s1 + $0x128] sm:$0xff]
        %v314 = vld [vmem:[%s1 + $0x130] sm:$0xff]
        %v315 = vld [vmem:[%s1 + $0x138] sm:$0xff]
        %v316 = vld [vmem:[%s1 + $0x140] sm:$0xff]
        %v317 = vld [vmem:[%s1 + $0x148] sm:$0xff]
        %v318 = vld [vmem:[%s1 + $0x150] sm:$0xff]
        %v319 = vld [vmem:[%s1 + $0x158] sm:$0xff]
        %v320 = vld [vmem:[%s1 + $0x160] sm:$0xff]
        %v321 = vld [vmem:[%s1 + $0x168] sm:$0xff]
        %v322 = vld [vmem:[%s1 + $0x170] sm:$0xff]
        %v323 = vld [vmem:[%s1 + $0x178] sm:$0xff]
        %v324 = vld [vmem:[%s1 + $0x180] sm:$0xff]
        %v325 = vld [vmem:[%s1 + $0x188] sm:$0xff]
        %v326 = vld [vmem:[%s1 + $0x190] sm:$0xff]
        %v327 = vld [vmem:[%s1 + $0x198] sm:$0xff]
        %v328 = vld [vmem:[%s1 + $0x1a0] sm:$0xff]
        %v329 = vld [vmem:[%s1 + $0x1a8] sm:$0xff]
        %v330 = vld [vmem:[%s1 + $0x1b0] sm:$0xff]
        %v331 = vld [vmem:[%s1 + $0x1b8] sm:$0xff]
        %v332 = vld [vmem:[%s1 + $0x1c0] sm:$0xff]
        %v333 = vld [vmem:[%s1 + $0x1c8] sm:$0xff]
        %v334 = vld [vmem:[%s1 + $0x1d0] sm:$0xff]
        %v335 = vld [vmem:[%s1 + $0x1d8] sm:$0xff]
        %v336 = vld [vmem:[%s1 + $0x1e0] sm:$0xff]
        %v337 = vld [vmem:[%s1 + $0x1e8] sm:$0xff]
        %v338 = vld [vmem:[%s1 + $0x1f0] sm:$0xff]
        %v339 = vld [vmem:[%s1 + $0x1f8] sm:$0xff]
        %v340 = vld [vmem:[%s1 + $0x200] sm:$0xff]
        %v341 = vld [vmem:[%s1 + $0x208] sm:$0xff]
        %v342 = vld [vmem:[%s1 + $0x210] sm:$0xff]
        %v343 = vld [vmem:[%s1 + $0x218] sm:$0xff]
        %v344 = vld [vmem:[%s1 + $0x220] sm:$0xff]
        %v345 = vld [vmem:[%s1 + $0x228] sm:$0xff]
        %v346 = vld [vmem:[%s1 + $0x230] sm:$0xff]
        %v347 = vld [vmem:[%s1 + $0x238] sm:$0xff]
        %v348 = vld [vmem:[%s1 + $0x240] sm:$0xff]
        %v349 = vld [vmem:[%s1 + $0x248] sm:$0xff]
        %v350 = vld [vmem:[%s1 + $0x250] sm:$0xff]
        %v351 = vld [vmem:[%s1 + $0x258] sm:$0xff]
        %v352 = vld [vmem:[%s1 + $0x260] sm:$0xff]
        %v353 = vld [vmem:[%s1 + $0x268] sm:$0xff]
        %v354 = vld [vmem:[%s1 + $0x270] sm:$0xff]
        %v355 = vld [vmem:[%s1 + $0x278] sm:$0xff]
        %v356 = vld [vmem:[%s1 + $0x280] sm:$0xff]
        %v357 = vld [vmem:[%s1 + $0x288] sm:$0xff]
        %v358 = vld [vmem:[%s1 + $0x290] sm:$0xff]
        %v359 = vld [vmem:[%s1 + $0x298] sm:$0xff]
        %v360 = vld [vmem:[%s1 + $0x2a0] sm:$0xff]
        %v361 = vld [vmem:[%s1 + $0x2a8] sm:$0xff]
        %v362 = vld [vmem:[%s1 + $0x2b0] sm:$0xff]
        %v363 = vld [vmem:[%s1 + $0x2b8] sm:$0xff]
        %v364 = vld [vmem:[%s1 + $0x2c0] sm:$0xff]
        %v365 = vld [vmem:[%s1 + $0x2c8] sm:$0xff]
        %v366 = vld [vmem:[%s1 + $0x2d0] sm:$0xff]
        %v367 = vld [vmem:[%s1 + $0x2d8] sm:$0xff]
        %v368 = vld [vmem:[%s1 + $0x2e0] sm:$0xff]
        %v369 = vld [vmem:[%s1 + $0x2e8] sm:$0xff]
        %v370 = vld [vmem:[%s1 + $0x2f0] sm:$0xff]
        %v371 = vld [vmem:[%s1 + $0x2f8] sm:$0xff]
        %v372 = vld [vmem:[%s1 + $0x300] sm:$0xff]
        %v373 = vld [vmem:[%s1 + $0x308] sm:$0xff]
        %v374 = vld [vmem:[%s1 + $0x310] sm:$0xff]
        %v375 = vld [vmem:[%s1 + $0x318] sm:$0xff]
        %vm376 = vcmask 130048
        %v378 = vsel %vm376, %v151, 0
        %v381 = vsel %vm376, %v155, 0
        %v384 = vsel %vm376, %v159, 0
        %v387 = vsel %vm376, %v163, 0
        %v390 = vsel %vm376, %v167, 0
        %v393 = vsel %vm376, %v171, 0
        %v396 = vsel %vm376, %v175, 0
        %v399 = vsel %vm376, %v179, 0
        %v402 = vsel %vm376, %v183, 0
        %v405 = vsel %vm376, %v187, 0
        %v408 = vsel %vm376, %v191, 0
        %v411 = vsel %vm376, %v195, 0
        %v414 = vsel %vm376, %v199, 0
        %v417 = vsel %vm376, %v203, 0
        %v420 = vsel %vm376, %v207, 0
        %v423 = vsel %vm376, %v211, 0
        %v426 = vsel %vm376, %v215, 0
        %v429 = vsel %vm376, %v219, 0
        %v432 = vsel %vm376, %v223, 0
        %v435 = vsel %vm376, %v227, 0
        %v438 = vsel %vm376, %v231, 0
        %v441 = vsel %vm376, %v235, 0
        %v444 = vsel %vm376, %v239, 0
        %v447 = vsel %vm376, %v243, 0
        %v450 = vsel %vm376, %v247, 0
        %v453 = vsel %vm376, %v251, 0
        %v456 = vsel %vm376, %v255, 0
        %v459 = vsel %vm376, %v259, 0
        %v462 = vsel %vm376, %v263, 0
        %v465 = vsel %vm376, %v267, 0
        %v468 = vsel %vm376, %v271, 0
        %v471 = vsel %vm376, %v275, 0
        %473 = vmatprep.subr.mxu0 %v277
        %474 = vmatpush1.msra.mxu0 %v276
        %475 = vmatprep.subr.mxu0 %v279
        %476 = vmatpush1.msra.mxu0 %v278
        %477 = vmatprep.subr.mxu0 %v281
        %478 = vmatpush1.msra.mxu0 %v280
        %479 = vmatprep.subr.mxu0 %v283
        %480 = vmatpush1.msra.mxu0 %v282
        %481 = vmatprep.subr.mxu0 %v285
        %482 = vmatpush1.msra.mxu0 %v284
        %483 = vmatprep.subr.mxu0 %v287
        %484 = vmatpush1.msra.mxu0 %v286
        %485 = vmatprep.subr.mxu0 %v289
        %486 = vmatpush1.msra.mxu0 %v288
        %487 = vmatprep.subr.mxu0 %v291
        %488 = vmatpush1.msra.mxu0 %v290
        %489 = vmatprep.subr.mxu0 %v293
        %490 = vmatpush1.msra.mxu0 %v292
        %491 = vmatprep.subr.mxu0 %v295
        %492 = vmatpush1.msra.mxu0 %v294
        %493 = vmatprep.subr.mxu0 %v297
        %494 = vmatpush1.msra.mxu0 %v296
        %495 = vmatprep.subr.mxu0 %v299
        %496 = vmatpush1.msra.mxu0 %v298
        %497 = vmatprep.subr.mxu0 %v301
        %498 = vmatpush1.msra.mxu0 %v300
        %499 = vmatprep.subr.mxu0 %v303
        %500 = vmatpush1.msra.mxu0 %v302
        %501 = vmatprep.subr.mxu0 %v305
        %502 = vmatpush1.msra.mxu0 %v304
        %503 = vmatprep.subr.mxu0 %v307
        %504 = vmatpush1.msra.mxu0 %v306
        %505 = vmatprep.subr.mxu0 %v309
        %506 = vmatpush1.msra.mxu0 %v308
        %507 = vmatprep.subr.mxu0 %v311
        %508 = vmatpush1.msra.mxu0 %v310
        %509 = vmatprep.subr.mxu0 %v313
        %510 = vmatpush1.msra.mxu0 %v312
        %511 = vmatprep.subr.mxu0 %v315
        %512 = vmatpush1.msra.mxu0 %v314
        %513 = vmatprep.subr.mxu0 %v317
        %514 = vmatpush1.msra.mxu0 %v316
        %515 = vmatprep.subr.mxu0 %v319
        %516 = vmatpush1.msra.mxu0 %v318
        %517 = vmatprep.subr.mxu0 %v321
        %518 = vmatpush1.msra.mxu0 %v320
        %519 = vmatprep.subr.mxu0 %v323
        %520 = vmatpush1.msra.mxu0 %v322
        %521 = vmatprep.subr.mxu0 %v325
        %522 = vmatpush1.msra.mxu0 %v324
        %523 = vmatprep.subr.mxu0 %v327
        %524 = vmatpush1.msra.mxu0 %v326
        %525 = vmatprep.subr.mxu0 %v329
        %526 = vmatpush1.msra.mxu0 %v328
        %527 = vmatprep.subr.mxu0 %v331
        %528 = vmatpush1.msra.mxu0 %v330
        %529 = vmatprep.subr.mxu0 %v333
        %530 = vmatpush1.msra.mxu0 %v332
        %531 = vmatprep.subr.mxu0 %v335
        %532 = vmatpush1.msra.mxu0 %v334
        %533 = vmatprep.subr.mxu0 %v337
        %534 = vmatpush1.msra.mxu0 %v336
        %535 = vmatprep.subr.mxu0 %v339
        %536 = vmatpush1.msra.mxu0 %v338
        %537 = vmatprep.mubr.f32.mxu0 %v149
        %538 = vmatmul.mubr.f32.gmra.mrb[0].mxu0 %v148
        %v539 = vpop.f32.mrb[0].mxu0
        %v540 = vadd.f32 0.0, %v539
        %v541 = vpop.f32.mrb[0].mxu0
        %v542 = vadd.f32 0.0, %v541
        %543 = vmatprep.mubr.f32.mxu0 %v153
        %544 = vmatmul.mubr.f32.gmra.mrb[0].mxu0 %v152
        %v545 = vpop.f32.mrb[0].mxu0
        %v546 = vadd.f32 0.0, %v545
        %v547 = vpop.f32.mrb[0].mxu0
        %v548 = vadd.f32 0.0, %v547
        %549 = vmatprep.mubr.f32.mxu0 %v157
        %550 = vmatmul.mubr.f32.gmra.mrb[0].mxu0 %v156
        %v551 = vpop.f32.mrb[0].mxu0
        %v552 = vadd.f32 0.0, %v551
        %v553 = vpop.f32.mrb[0].mxu0
        %v554 = vadd.f32 0.0, %v553
        %555 = vmatprep.mubr.f32.mxu0 %v161
        %556 = vmatmul.mubr.f32.gmra.mrb[0].mxu0 %v160
        %v557 = vpop.f32.mrb[0].mxu0
        %v558 = vadd.f32 0.0, %v557
        %v559 = vpop.f32.mrb[0].mxu0
        %v560 = vadd.f32 0.0, %v559
        %561 = vmatprep.mubr.f32.mxu0 %v165
        %562 = vmatmul.mubr.f32.gmra.mrb[0].mxu0 %v164
        %v563 = vpop.f32.mrb[0].mxu0
        %v564 = vadd.f32 0.0, %v563
        %v565 = vpop.f32.mrb[0].mxu0
        %v566 = vadd.f32 0.0, %v565
        %567 = vmatprep.mubr.f32.mxu0 %v169
        %568 = vmatmul.mubr.f32.gmra.mrb[0].mxu0 %v168
        %v569 = vpop.f32.mrb[0].mxu0
        %v570 = vadd.f32 0.0, %v569
        %v571 = vpop.f32.mrb[0].mxu0
        %v572 = vadd.f32 0.0, %v571
        %573 = vmatprep.mubr.f32.mxu0 %v173
        %574 = vmatmul.mubr.f32.gmra.mrb[0].mxu0 %v172
        %v575 = vpop.f32.mrb[0].mxu0
        %v576 = vadd.f32 0.0, %v575
        %v577 = vpop.f32.mrb[0].mxu0
        %v578 = vadd.f32 0.0, %v577
        %579 = vmatprep.mubr.f32.mxu0 %v177
        %580 = vmatmul.mubr.f32.gmra.mrb[0].mxu0 %v176
        %v581 = vpop.f32.mrb[0].mxu0
        %v582 = vadd.f32 0.0, %v581
        %v583 = vpop.f32.mrb[0].mxu0
        %v584 = vadd.f32 0.0, %v583
        %585 = vmatprep.mubr.f32.mxu0 %v181
        %586 = vmatmul.mubr.f32.gmra.mrb[0].mxu0 %v180
        %v587 = vpop.f32.mrb[0].mxu0
        %v588 = vadd.f32 0.0, %v587
        %v589 = vpop.f32.mrb[0].mxu0
        %v590 = vadd.f32 0.0, %v589
        %591 = vmatprep.mubr.f32.mxu0 %v185
        %592 = vmatmul.mubr.f32.gmra.mrb[0].mxu0 %v184
        %v593 = vpop.f32.mrb[0].mxu0
        %v594 = vadd.f32 0.0, %v593
        %v595 = vpop.f32.mrb[0].mxu0
        %v596 = vadd.f32 0.0, %v595
        %597 = vmatprep.mubr.f32.mxu0 %v189
        %598 = vmatmul.mubr.f32.gmra.mrb[0].mxu0 %v188
        %v599 = vpop.f32.mrb[0].mxu0
        %v600 = vadd.f32 0.0, %v599
        %v601 = vpop.f32.mrb[0].mxu0
        %v602 = vadd.f32 0.0, %v601
        %603 = vmatprep.mubr.f32.mxu0 %v193
        %604 = vmatmul.mubr.f32.gmra.mrb[0].mxu0 %v192
        %v605 = vpop.f32.mrb[0].mxu0
        %v606 = vadd.f32 0.0, %v605
        %v607 = vpop.f32.mrb[0].mxu0
        %v608 = vadd.f32 0.0, %v607
        %609 = vmatprep.mubr.f32.mxu0 %v197
        %610 = vmatmul.mubr.f32.gmra.mrb[0].mxu0 %v196
        %v611 = vpop.f32.mrb[0].mxu0
        %v612 = vadd.f32 0.0, %v611
        %v613 = vpop.f32.mrb[0].mxu0
        %v614 = vadd.f32 0.0, %v613
        %615 = vmatprep.mubr.f32.mxu0 %v201
        %616 = vmatmul.mubr.f32.gmra.mrb[0].mxu0 %v200
        %v617 = vpop.f32.mrb[0].mxu0
        %v618 = vadd.f32 0.0, %v617
        %v619 = vpop.f32.mrb[0].mxu0
        %v620 = vadd.f32 0.0, %v619
        %621 = vmatprep.mubr.f32.mxu0 %v205
        %622 = vmatmul.mubr.f32.gmra.mrb[0].mxu0 %v204
        %v623 = vpop.f32.mrb[0].mxu0
        %v624 = vadd.f32 0.0, %v623
        %v625 = vpop.f32.mrb[0].mxu0
        %v626 = vadd.f32 0.0, %v625
        %627 = vmatprep.mubr.f32.mxu0 %v209
        %628 = vmatmul.mubr.f32.gmra.mrb[0].mxu0 %v208
        %v629 = vpop.f32.mrb[0].mxu0
        %v630 = vadd.f32 0.0, %v629
        %v631 = vpop.f32.mrb[0].mxu0
        %v632 = vadd.f32 0.0, %v631
        %633 = vmatprep.mubr.f32.mxu0 %v213
        %634 = vmatmul.mubr.f32.gmra.mrb[0].mxu0 %v212
        %v635 = vpop.f32.mrb[0].mxu0
        %v636 = vadd.f32 0.0, %v635
        %v637 = vpop.f32.mrb[0].mxu0
        %v638 = vadd.f32 0.0, %v637
        %639 = vmatprep.mubr.f32.mxu0 %v217
        %640 = vmatmul.mubr.f32.gmra.mrb[0].mxu0 %v216
        %v641 = vpop.f32.mrb[0].mxu0
        %v642 = vadd.f32 0.0, %v641
        %v643 = vpop.f32.mrb[0].mxu0
        %v644 = vadd.f32 0.0, %v643
        %645 = vmatprep.mubr.f32.mxu0 %v221
        %646 = vmatmul.mubr.f32.gmra.mrb[0].mxu0 %v220
        %v647 = vpop.f32.mrb[0].mxu0
        %v648 = vadd.f32 0.0, %v647
        %v649 = vpop.f32.mrb[0].mxu0
        %v650 = vadd.f32 0.0, %v649
        %651 = vmatprep.mubr.f32.mxu0 %v225
        %652 = vmatmul.mubr.f32.gmra.mrb[0].mxu0 %v224
        %v653 = vpop.f32.mrb[0].mxu0
        %v654 = vadd.f32 0.0, %v653
        %v655 = vpop.f32.mrb[0].mxu0
        %v656 = vadd.f32 0.0, %v655
        %657 = vmatprep.mubr.f32.mxu0 %v229
        %658 = vmatmul.mubr.f32.gmra.mrb[0].mxu0 %v228
        %v659 = vpop.f32.mrb[0].mxu0
        %v660 = vadd.f32 0.0, %v659
        %v661 = vpop.f32.mrb[0].mxu0
        %v662 = vadd.f32 0.0, %v661
        %663 = vmatprep.mubr.f32.mxu0 %v233
        %664 = vmatmul.mubr.f32.gmra.mrb[0].mxu0 %v232
        %v665 = vpop.f32.mrb[0].mxu0
        %v666 = vadd.f32 0.0, %v665
        %v667 = vpop.f32.mrb[0].mxu0
        %v668 = vadd.f32 0.0, %v667
        %669 = vmatprep.mubr.f32.mxu0 %v237
        %670 = vmatmul.mubr.f32.gmra.mrb[0].mxu0 %v236
        %v671 = vpop.f32.mrb[0].mxu0
        %v672 = vadd.f32 0.0, %v671
        %v673 = vpop.f32.mrb[0].mxu0
        %v674 = vadd.f32 0.0, %v673
        %675 = vmatprep.mubr.f32.mxu0 %v241
        %676 = vmatmul.mubr.f32.gmra.mrb[0].mxu0 %v240
        %v677 = vpop.f32.mrb[0].mxu0
        %v678 = vadd.f32 0.0, %v677
        %v679 = vpop.f32.mrb[0].mxu0
        %v680 = vadd.f32 0.0, %v679
        %681 = vmatprep.mubr.f32.mxu0 %v245
        %682 = vmatmul.mubr.f32.gmra.mrb[0].mxu0 %v244
        %v683 = vpop.f32.mrb[0].mxu0
        %v684 = vadd.f32 0.0, %v683
        %v685 = vpop.f32.mrb[0].mxu0
        %v686 = vadd.f32 0.0, %v685
        %687 = vmatprep.mubr.f32.mxu0 %v249
        %688 = vmatmul.mubr.f32.gmra.mrb[0].mxu0 %v248
        %v689 = vpop.f32.mrb[0].mxu0
        %v690 = vadd.f32 0.0, %v689
        %v691 = vpop.f32.mrb[0].mxu0
        %v692 = vadd.f32 0.0, %v691
        %693 = vmatprep.mubr.f32.mxu0 %v253
        %694 = vmatmul.mubr.f32.gmra.mrb[0].mxu0 %v252
        %v695 = vpop.f32.mrb[0].mxu0
        %v696 = vadd.f32 0.0, %v695
        %v697 = vpop.f32.mrb[0].mxu0
        %v698 = vadd.f32 0.0, %v697
        %699 = vmatprep.mubr.f32.mxu0 %v257
        %700 = vmatmul.mubr.f32.gmra.mrb[0].mxu0 %v256
        %v701 = vpop.f32.mrb[0].mxu0
        %v702 = vadd.f32 0.0, %v701
        %v703 = vpop.f32.mrb[0].mxu0
        %v704 = vadd.f32 0.0, %v703
        %705 = vmatprep.mubr.f32.mxu0 %v261
        %706 = vmatmul.mubr.f32.gmra.mrb[0].mxu0 %v260
        %v707 = vpop.f32.mrb[0].mxu0
        %v708 = vadd.f32 0.0, %v707
        %v709 = vpop.f32.mrb[0].mxu0
        %v710 = vadd.f32 0.0, %v709
        %711 = vmatprep.mubr.f32.mxu0 %v265
        %712 = vmatmul.mubr.f32.gmra.mrb[0].mxu0 %v264
        %v713 = vpop.f32.mrb[0].mxu0
        %v714 = vadd.f32 0.0, %v713
        %v715 = vpop.f32.mrb[0].mxu0
        %v716 = vadd.f32 0.0, %v715
        %717 = vmatprep.mubr.f32.mxu0 %v269
        %718 = vmatmul.mubr.f32.gmra.mrb[0].mxu0 %v268
        %v719 = vpop.f32.mrb[0].mxu0
        %v720 = vadd.f32 0.0, %v719
        %v721 = vpop.f32.mrb[0].mxu0
        %v722 = vadd.f32 0.0, %v721
        %723 = vmatprep.mubr.f32.mxu0 %v273
        %724 = vmatmul.mubr.f32.gmra.mrb[0].mxu0 %v272
        %v725 = vpop.f32.mrb[0].mxu0
        %v726 = vadd.f32 0.0, %v725
        %v727 = vpop.f32.mrb[0].mxu0
        %v728 = vadd.f32 0.0, %v727
        %729 = vdwg.mxu0
        %730 = vmatprep.subr.mxu0 %v341
        %731 = vmatpush1.msra.mxu0 %v340
        %732 = vmatprep.subr.mxu0 %v343
        %733 = vmatpush1.msra.mxu0 %v342
        %734 = vmatprep.subr.mxu0 %v345
        %735 = vmatpush1.msra.mxu0 %v344
        %736 = vmatprep.subr.mxu0 %v347
        %737 = vmatpush1.msra.mxu0 %v346
        %738 = vmatprep.subr.mxu0 %v349
        %739 = vmatpush1.msra.mxu0 %v348
        %740 = vmatprep.subr.mxu0 %v351
        %741 = vmatpush1.msra.mxu0 %v350
        %742 = vmatprep.subr.mxu0 %v353
        %743 = vmatpush1.msra.mxu0 %v352
        %744 = vmatprep.subr.mxu0 %v355
        %745 = vmatpush1.msra.mxu0 %v354
        %746 = vmatprep.subr.mxu0 %v357
        %747 = vmatpush1.msra.mxu0 %v356
        %748 = vmatprep.subr.mxu0 %v359
        %749 = vmatpush1.msra.mxu0 %v358
        %750 = vmatprep.subr.mxu0 %v361
        %751 = vmatpush1.msra.mxu0 %v360
        %752 = vmatprep.subr.mxu0 %v363
        %753 = vmatpush1.msra.mxu0 %v362
        %754 = vmatprep.subr.mxu0 %v365
        %755 = vmatpush1.msra.mxu0 %v364
        %756 = vmatprep.subr.mxu0 %v367
        %757 = vmatpush1.msra.mxu0 %v366
        %758 = vmatprep.subr.mxu0 %v369
        %759 = vmatpush1.msra.mxu0 %v368
        %760 = vmatprep.subr.mxu0 %v371
        %761 = vmatpush1.msra.mxu0 %v370
        %762 = vmatprep.subr.mxu0 %v373
        %763 = vmatpush1.msra.mxu0 %v372
        %764 = vmatprep.subr.mxu0 %v375
        %765 = vmatpush1.msra.mxu0 %v374
        %766 = vmatprep.subr.mxu0 0.0
        %767 = vmatpush1.msra.mxu0 0.0
        %768 = vmatprep.subr.mxu0 0.0
        %769 = vmatpush1.msra.mxu0 0.0
        %770 = vmatprep.subr.mxu0 0.0
        %771 = vmatpush1.msra.mxu0 0.0
        %772 = vmatprep.subr.mxu0 0.0
        %773 = vmatpush1.msra.mxu0 0.0
        %774 = vmatprep.subr.mxu0 0.0
        %775 = vmatpush1.msra.mxu0 0.0
        %776 = vmatprep.subr.mxu0 0.0
        %777 = vmatpush1.msra.mxu0 0.0
        %778 = vmatprep.subr.mxu0 0.0
        %779 = vmatpush1.msra.mxu0 0.0
        %780 = vmatprep.subr.mxu0 0.0
        %781 = vmatpush1.msra.mxu0 0.0
        %782 = vmatprep.subr.mxu0 0.0
        %783 = vmatpush1.msra.mxu0 0.0
        %784 = vmatprep.subr.mxu0 0.0
        %785 = vmatpush1.msra.mxu0 0.0
        %786 = vmatprep.subr.mxu0 0.0
        %787 = vmatpush1.msra.mxu0 0.0
        %788 = vmatprep.subr.mxu0 0.0
        %789 = vmatpush1.msra.mxu0 0.0
        %790 = vmatprep.subr.mxu0 0.0
        %791 = vmatpush1.msra.mxu0 0.0
        %792 = vmatprep.subr.mxu0 0.0
        %793 = vmatpush1.msra.mxu0 0.0
        %794 = vmatprep.mubr.f32.mxu0 %v378
        %795 = vmatmul.mubr.f32.gmra.mrb[0].mxu0 %v150
        %v796 = vpop.f32.mrb[0].mxu0
        %v797 = vadd.f32 %v540, %v796
        %v798 = vpop.f32.mrb[0].mxu0
        %v799 = vadd.f32 %v542, %v798
        %800 = vmatprep.mubr.f32.mxu0 %v381
        %801 = vmatmul.mubr.f32.gmra.mrb[0].mxu0 %v154
        %v802 = vpop.f32.mrb[0].mxu0
        %v803 = vadd.f32 %v546, %v802
        %v804 = vpop.f32.mrb[0].mxu0
        %v805 = vadd.f32 %v548, %v804
        %806 = vmatprep.mubr.f32.mxu0 %v384
        %807 = vmatmul.mubr.f32.gmra.mrb[0].mxu0 %v158
        %v808 = vpop.f32.mrb[0].mxu0
        %v809 = vadd.f32 %v552, %v808
        %v810 = vpop.f32.mrb[0].mxu0
        %v811 = vadd.f32 %v554, %v810
        %812 = vmatprep.mubr.f32.mxu0 %v387
        %813 = vmatmul.mubr.f32.gmra.mrb[0].mxu0 %v162
        %v814 = vpop.f32.mrb[0].mxu0
        %v815 = vadd.f32 %v558, %v814
        %v816 = vpop.f32.mrb[0].mxu0
        %v817 = vadd.f32 %v560, %v816
        %818 = vmatprep.mubr.f32.mxu0 %v390
        %819 = vmatmul.mubr.f32.gmra.mrb[0].mxu0 %v166
        %v820 = vpop.f32.mrb[0].mxu0
        %v821 = vadd.f32 %v564, %v820
        %v822 = vpop.f32.mrb[0].mxu0
        %v823 = vadd.f32 %v566, %v822
        %824 = vmatprep.mubr.f32.mxu0 %v393
        %825 = vmatmul.mubr.f32.gmra.mrb[0].mxu0 %v170
        %v826 = vpop.f32.mrb[0].mxu0
        %v827 = vadd.f32 %v570, %v826
        %v828 = vpop.f32.mrb[0].mxu0
        %v829 = vadd.f32 %v572, %v828
        %830 = vmatprep.mubr.f32.mxu0 %v396
        %831 = vmatmul.mubr.f32.gmra.mrb[0].mxu0 %v174
        %v832 = vpop.f32.mrb[0].mxu0
        %v833 = vadd.f32 %v576, %v832
        %v834 = vpop.f32.mrb[0].mxu0
        %v835 = vadd.f32 %v578, %v834
        %836 = vmatprep.mubr.f32.mxu0 %v399
        %837 = vmatmul.mubr.f32.gmra.mrb[0].mxu0 %v178
        %v838 = vpop.f32.mrb[0].mxu0
        %v839 = vadd.f32 %v582, %v838
        %v840 = vpop.f32.mrb[0].mxu0
        %v841 = vadd.f32 %v584, %v840
        %842 = vmatprep.mubr.f32.mxu0 %v402
        %843 = vmatmul.mubr.f32.gmra.mrb[0].mxu0 %v182
        %v844 = vpop.f32.mrb[0].mxu0
        %v845 = vadd.f32 %v588, %v844
        %v846 = vpop.f32.mrb[0].mxu0
        %v847 = vadd.f32 %v590, %v846
        %848 = vmatprep.mubr.f32.mxu0 %v405
        %849 = vmatmul.mubr.f32.gmra.mrb[0].mxu0 %v186
        %v850 = vpop.f32.mrb[0].mxu0
        %v851 = vadd.f32 %v594, %v850
        %v852 = vpop.f32.mrb[0].mxu0
        %v853 = vadd.f32 %v596, %v852
        %854 = vmatprep.mubr.f32.mxu0 %v408
        %855 = vmatmul.mubr.f32.gmra.mrb[0].mxu0 %v190
        %v856 = vpop.f32.mrb[0].mxu0
        %v857 = vadd.f32 %v600, %v856
        %v858 = vpop.f32.mrb[0].mxu0
        %v859 = vadd.f32 %v602, %v858
        %860 = vmatprep.mubr.f32.mxu0 %v411
        %861 = vmatmul.mubr.f32.gmra.mrb[0].mxu0 %v194
        %v862 = vpop.f32.mrb[0].mxu0
        %v863 = vadd.f32 %v606, %v862
        %v864 = vpop.f32.mrb[0].mxu0
        %v865 = vadd.f32 %v608, %v864
        %866 = vmatprep.mubr.f32.mxu0 %v414
        %867 = vmatmul.mubr.f32.gmra.mrb[0].mxu0 %v198
        %v868 = vpop.f32.mrb[0].mxu0
        %v869 = vadd.f32 %v612, %v868
        %v870 = vpop.f32.mrb[0].mxu0
        %v871 = vadd.f32 %v614, %v870
        %872 = vmatprep.mubr.f32.mxu0 %v417
        %873 = vmatmul.mubr.f32.gmra.mrb[0].mxu0 %v202
        %v874 = vpop.f32.mrb[0].mxu0
        %v875 = vadd.f32 %v618, %v874
        %v876 = vpop.f32.mrb[0].mxu0
        %v877 = vadd.f32 %v620, %v876
        %878 = vmatprep.mubr.f32.mxu0 %v420
        %879 = vmatmul.mubr.f32.gmra.mrb[0].mxu0 %v206
        %v880 = vpop.f32.mrb[0].mxu0
        %v881 = vadd.f32 %v624, %v880
        %v882 = vpop.f32.mrb[0].mxu0
        %v883 = vadd.f32 %v626, %v882
        %884 = vmatprep.mubr.f32.mxu0 %v423
        %885 = vmatmul.mubr.f32.gmra.mrb[0].mxu0 %v210
        %v886 = vpop.f32.mrb[0].mxu0
        %v887 = vadd.f32 %v630, %v886
        %v888 = vpop.f32.mrb[0].mxu0
        %v889 = vadd.f32 %v632, %v888
        %890 = vmatprep.mubr.f32.mxu0 %v426
        %891 = vmatmul.mubr.f32.gmra.mrb[0].mxu0 %v214
        %v892 = vpop.f32.mrb[0].mxu0
        %v893 = vadd.f32 %v636, %v892
        %v894 = vpop.f32.mrb[0].mxu0
        %v895 = vadd.f32 %v638, %v894
        %896 = vmatprep.mubr.f32.mxu0 %v429
        %897 = vmatmul.mubr.f32.gmra.mrb[0].mxu0 %v218
        %v898 = vpop.f32.mrb[0].mxu0
        %v899 = vadd.f32 %v642, %v898
        %v900 = vpop.f32.mrb[0].mxu0
        %v901 = vadd.f32 %v644, %v900
        %902 = vmatprep.mubr.f32.mxu0 %v432
        %903 = vmatmul.mubr.f32.gmra.mrb[0].mxu0 %v222
        %v904 = vpop.f32.mrb[0].mxu0
        %v905 = vadd.f32 %v648, %v904
        %v906 = vpop.f32.mrb[0].mxu0
        %v907 = vadd.f32 %v650, %v906
        %908 = vmatprep.mubr.f32.mxu0 %v435
        %909 = vmatmul.mubr.f32.gmra.mrb[0].mxu0 %v226
        %v910 = vpop.f32.mrb[0].mxu0
        %v911 = vadd.f32 %v654, %v910
        %v912 = vpop.f32.mrb[0].mxu0
        %v913 = vadd.f32 %v656, %v912
        %914 = vmatprep.mubr.f32.mxu0 %v438
        %915 = vmatmul.mubr.f32.gmra.mrb[0].mxu0 %v230
        %v916 = vpop.f32.mrb[0].mxu0
        %v917 = vadd.f32 %v660, %v916
        %v918 = vpop.f32.mrb[0].mxu0
        %v919 = vadd.f32 %v662, %v918
        %920 = vmatprep.mubr.f32.mxu0 %v441
        %921 = vmatmul.mubr.f32.gmra.mrb[0].mxu0 %v234
        %v922 = vpop.f32.mrb[0].mxu0
        %v923 = vadd.f32 %v666, %v922
        %v924 = vpop.f32.mrb[0].mxu0
        %v925 = vadd.f32 %v668, %v924
        %926 = vmatprep.mubr.f32.mxu0 %v444
        %927 = vmatmul.mubr.f32.gmra.mrb[0].mxu0 %v238
        %v928 = vpop.f32.mrb[0].mxu0
        %v929 = vadd.f32 %v672, %v928
        %v930 = vpop.f32.mrb[0].mxu0
        %v931 = vadd.f32 %v674, %v930
        %932 = vmatprep.mubr.f32.mxu0 %v447
        %933 = vmatmul.mubr.f32.gmra.mrb[0].mxu0 %v242
        %v934 = vpop.f32.mrb[0].mxu0
        %v935 = vadd.f32 %v678, %v934
        %v936 = vpop.f32.mrb[0].mxu0
        %v937 = vadd.f32 %v680, %v936
        %938 = vmatprep.mubr.f32.mxu0 %v450
        %939 = vmatmul.mubr.f32.gmra.mrb[0].mxu0 %v246
        %v940 = vpop.f32.mrb[0].mxu0
        %v941 = vadd.f32 %v684, %v940
        %v942 = vpop.f32.mrb[0].mxu0
        %v943 = vadd.f32 %v686, %v942
        %944 = vmatprep.mubr.f32.mxu0 %v453
        %945 = vmatmul.mubr.f32.gmra.mrb[0].mxu0 %v250
        %v946 = vpop.f32.mrb[0].mxu0
        %v947 = vadd.f32 %v690, %v946
        %v948 = vpop.f32.mrb[0].mxu0
        %v949 = vadd.f32 %v692, %v948
        %950 = vmatprep.mubr.f32.mxu0 %v456
        %951 = vmatmul.mubr.f32.gmra.mrb[0].mxu0 %v254
        %v952 = vpop.f32.mrb[0].mxu0
        %v953 = vadd.f32 %v696, %v952
        %v954 = vpop.f32.mrb[0].mxu0
        %v955 = vadd.f32 %v698, %v954
        %956 = vmatprep.mubr.f32.mxu0 %v459
        %957 = vmatmul.mubr.f32.gmra.mrb[0].mxu0 %v258
        %v958 = vpop.f32.mrb[0].mxu0
        %v959 = vadd.f32 %v702, %v958
        %v960 = vpop.f32.mrb[0].mxu0
        %v961 = vadd.f32 %v704, %v960
        %962 = vmatprep.mubr.f32.mxu0 %v462
        %963 = vmatmul.mubr.f32.gmra.mrb[0].mxu0 %v262
        %v964 = vpop.f32.mrb[0].mxu0
        %v965 = vadd.f32 %v708, %v964
        %v966 = vpop.f32.mrb[0].mxu0
        %v967 = vadd.f32 %v710, %v966
        %968 = vmatprep.mubr.f32.mxu0 %v465
        %969 = vmatmul.mubr.f32.gmra.mrb[0].mxu0 %v266
        %v970 = vpop.f32.mrb[0].mxu0
        %v971 = vadd.f32 %v714, %v970
        %v972 = vpop.f32.mrb[0].mxu0
        %v973 = vadd.f32 %v716, %v972
        %974 = vmatprep.mubr.f32.mxu0 %v468
        %975 = vmatmul.mubr.f32.gmra.mrb[0].mxu0 %v270
        %v976 = vpop.f32.mrb[0].mxu0
        %v977 = vadd.f32 %v720, %v976
        %v978 = vpop.f32.mrb[0].mxu0
        %v979 = vadd.f32 %v722, %v978
        %980 = vmatprep.mubr.f32.mxu0 %v471
        %981 = vmatmul.mubr.f32.gmra.mrb[0].mxu0 %v274
        %v982 = vpop.f32.mrb[0].mxu0
        %v983 = vadd.f32 %v726, %v982
        %v984 = vpop.f32.mrb[0].mxu0
        %v985 = vadd.f32 %v728, %v984
        %986 = vdwg.mxu0
        %v987 = vmul.f32 %v797, 0.175
        %v988 = vmul.f32 %v799, 0.175
        %v989 = vmul.f32 %v803, 0.175
        %v990 = vmul.f32 %v805, 0.175
        %v991 = vmul.f32 %v809, 0.175
        %v992 = vmul.f32 %v811, 0.175
        %v993 = vmul.f32 %v815, 0.175
        %v994 = vmul.f32 %v817, 0.175
        %v995 = vmul.f32 %v821, 0.175
        %v996 = vmul.f32 %v823, 0.175
        %v997 = vmul.f32 %v827, 0.175
        %v998 = vmul.f32 %v829, 0.175
        %v999 = vmul.f32 %v833, 0.175
        %v1000 = vmul.f32 %v835, 0.175
        %v1001 = vmul.f32 %v839, 0.175
        %v1002 = vmul.f32 %v841, 0.175
        %v1003 = vmul.f32 %v845, 0.175
        %v1004 = vmul.f32 %v847, 0.175
        %v1005 = vmul.f32 %v851, 0.175
        %v1006 = vmul.f32 %v853, 0.175
        %v1007 = vmul.f32 %v857, 0.175
        %v1008 = vmul.f32 %v859, 0.175
        %v1009 = vmul.f32 %v863, 0.175
        %v1010 = vmul.f32 %v865, 0.175
        %v1011 = vmul.f32 %v869, 0.175
        %v1012 = vmul.f32 %v871, 0.175
        %v1013 = vmul.f32 %v875, 0.175
        %v1014 = vmul.f32 %v877, 0.175
        %v1015 = vmul.f32 %v881, 0.175
        %v1016 = vmul.f32 %v883, 0.175
        %v1017 = vmul.f32 %v887, 0.175
        %v1018 = vmul.f32 %v889, 0.175
        %v1019 = vmul.f32 %v893, 0.175
        %v1020 = vmul.f32 %v895, 0.175
        %v1021 = vmul.f32 %v899, 0.175
        %v1022 = vmul.f32 %v901, 0.175
        %v1023 = vmul.f32 %v905, 0.175
        %v1024 = vmul.f32 %v907, 0.175
        %v1025 = vmul.f32 %v911, 0.175
        %v1026 = vmul.f32 %v913, 0.175
        %v1027 = vmul.f32 %v917, 0.175
        %v1028 = vmul.f32 %v919, 0.175
        %v1029 = vmul.f32 %v923, 0.175
        %v1030 = vmul.f32 %v925, 0.175
        %v1031 = vmul.f32 %v929, 0.175
        %v1032 = vmul.f32 %v931, 0.175
        %v1033 = vmul.f32 %v935, 0.175
        %v1034 = vmul.f32 %v937, 0.175
        %v1035 = vmul.f32 %v941, 0.175
        %v1036 = vmul.f32 %v943, 0.175
        %v1037 = vmul.f32 %v947, 0.175
        %v1038 = vmul.f32 %v949, 0.175
        %v1039 = vmul.f32 %v953, 0.175
        %v1040 = vmul.f32 %v955, 0.175
        %v1041 = vmul.f32 %v959, 0.175
        %v1042 = vmul.f32 %v961, 0.175
        %v1043 = vmul.f32 %v965, 0.175
        %v1044 = vmul.f32 %v967, 0.175
        %v1045 = vmul.f32 %v971, 0.175
        %v1046 = vmul.f32 %v973, 0.175
        %v1047 = vmul.f32 %v977, 0.175
        %v1048 = vmul.f32 %v979, 0.175
        %v1049 = vmul.f32 %v983, 0.175
        %v1050 = vmul.f32 %v985, 0.175
        %v1051 = vmax.f32 %v797, %v987
        %v1052 = vmax.f32 %v799, %v988
        %v1053 = vmax.f32 %v803, %v989
        %v1054 = vmax.f32 %v805, %v990
        %v1055 = vmax.f32 %v809, %v991
        %v1056 = vmax.f32 %v811, %v992
        %v1057 = vmax.f32 %v815, %v993
        %v1058 = vmax.f32 %v817, %v994
        %v1059 = vmax.f32 %v821, %v995
        %v1060 = vmax.f32 %v823, %v996
        %v1061 = vmax.f32 %v827, %v997
        %v1062 = vmax.f32 %v829, %v998
        %v1063 = vmax.f32 %v833, %v999
        %v1064 = vmax.f32 %v835, %v1000
        %v1065 = vmax.f32 %v839, %v1001
        %v1066 = vmax.f32 %v841, %v1002
        %v1067 = vmax.f32 %v845, %v1003
        %v1068 = vmax.f32 %v847, %v1004
        %v1069 = vmax.f32 %v851, %v1005
        %v1070 = vmax.f32 %v853, %v1006
        %v1071 = vmax.f32 %v857, %v1007
        %v1072 = vmax.f32 %v859, %v1008
        %v1073 = vmax.f32 %v863, %v1009
        %v1074 = vmax.f32 %v865, %v1010
        %v1075 = vmax.f32 %v869, %v1011
        %v1076 = vmax.f32 %v871, %v1012
        %v1077 = vmax.f32 %v875, %v1013
        %v1078 = vmax.f32 %v877, %v1014
        %v1079 = vmax.f32 %v881, %v1015
        %v1080 = vmax.f32 %v883, %v1016
        %v1081 = vmax.f32 %v887, %v1017
        %v1082 = vmax.f32 %v889, %v1018
        %v1083 = vmax.f32 %v893, %v1019
        %v1084 = vmax.f32 %v895, %v1020
        %v1085 = vmax.f32 %v899, %v1021
        %v1086 = vmax.f32 %v901, %v1022
        %v1087 = vmax.f32 %v905, %v1023
        %v1088 = vmax.f32 %v907, %v1024
        %v1089 = vmax.f32 %v911, %v1025
        %v1090 = vmax.f32 %v913, %v1026
        %v1091 = vmax.f32 %v917, %v1027
        %v1092 = vmax.f32 %v919, %v1028
        %v1093 = vmax.f32 %v923, %v1029
        %v1094 = vmax.f32 %v925, %v1030
        %v1095 = vmax.f32 %v929, %v1031
        %v1096 = vmax.f32 %v931, %v1032
        %v1097 = vmax.f32 %v935, %v1033
        %v1098 = vmax.f32 %v937, %v1034
        %v1099 = vmax.f32 %v941, %v1035
        %v1100 = vmax.f32 %v943, %v1036
        %v1101 = vmax.f32 %v947, %v1037
        %v1102 = vmax.f32 %v949, %v1038
        %v1103 = vmax.f32 %v953, %v1039
        %v1104 = vmax.f32 %v955, %v1040
        %v1105 = vmax.f32 %v959, %v1041
        %v1106 = vmax.f32 %v961, %v1042
        %v1107 = vmax.f32 %v965, %v1043
        %v1108 = vmax.f32 %v967, %v1044
        %v1109 = vmax.f32 %v971, %v1045
        %v1110 = vmax.f32 %v973, %v1046
        %v1111 = vmax.f32 %v977, %v1047
        %v1112 = vmax.f32 %v979, %v1048
        %v1113 = vmax.f32 %v983, %v1049
        %v1114 = vmax.f32 %v985, %v1050
        %1115 = vst [vmem:[%s139] sm:$0xff] %v1051
        %1116 = vst [vmem:[%s139 + $0x8] sm:$0xff] %v1052
        %1117 = vst [vmem:[%s139 + $0x10] sm:$0xff] %v1053
        %1118 = vst [vmem:[%s139 + $0x18] sm:$0xff] %v1054
        %1119 = vst [vmem:[%s139 + $0x20] sm:$0xff] %v1055
        %1120 = vst [vmem:[%s139 + $0x28] sm:$0xff] %v1056
        %1121 = vst [vmem:[%s139 + $0x30] sm:$0xff] %v1057
        %1122 = vst [vmem:[%s139 + $0x38] sm:$0xff] %v1058
        %1123 = vst [vmem:[%s139 + $0x40] sm:$0xff] %v1059
        %1124 = vst [vmem:[%s139 + $0x48] sm:$0xff] %v1060
        %1125 = vst [vmem:[%s139 + $0x50] sm:$0xff] %v1061
        %1126 = vst [vmem:[%s139 + $0x58] sm:$0xff] %v1062
        %1127 = vst [vmem:[%s139 + $0x60] sm:$0xff] %v1063
        %1128 = vst [vmem:[%s139 + $0x68] sm:$0xff] %v1064
        %1129 = vst [vmem:[%s139 + $0x70] sm:$0xff] %v1065
        %1130 = vst [vmem:[%s139 + $0x78] sm:$0xff] %v1066
        %1131 = vst [vmem:[%s139 + $0x80] sm:$0xff] %v1067
        %1132 = vst [vmem:[%s139 + $0x88] sm:$0xff] %v1068
        %1133 = vst [vmem:[%s139 + $0x90] sm:$0xff] %v1069
        %1134 = vst [vmem:[%s139 + $0x98] sm:$0xff] %v1070
        %1135 = vst [vmem:[%s139 + $0xa0] sm:$0xff] %v1071
        %1136 = vst [vmem:[%s139 + $0xa8] sm:$0xff] %v1072
        %1137 = vst [vmem:[%s139 + $0xb0] sm:$0xff] %v1073
        %1138 = vst [vmem:[%s139 + $0xb8] sm:$0xff] %v1074
        %1139 = vst [vmem:[%s139 + $0xc0] sm:$0xff] %v1075
        %1140 = vst [vmem:[%s139 + $0xc8] sm:$0xff] %v1076
        %1141 = vst [vmem:[%s139 + $0xd0] sm:$0xff] %v1077
        %1142 = vst [vmem:[%s139 + $0xd8] sm:$0xff] %v1078
        %1143 = vst [vmem:[%s139 + $0xe0] sm:$0xff] %v1079
        %1144 = vst [vmem:[%s139 + $0xe8] sm:$0xff] %v1080
        %1145 = vst [vmem:[%s139 + $0xf0] sm:$0xff] %v1081
        %1146 = vst [vmem:[%s139 + $0xf8] sm:$0xff] %v1082
        %1147 = vst [vmem:[%s139 + $0x100] sm:$0xff] %v1083
        %1148 = vst [vmem:[%s139 + $0x108] sm:$0xff] %v1084
        %1149 = vst [vmem:[%s139 + $0x110] sm:$0xff] %v1085
        %1150 = vst [vmem:[%s139 + $0x118] sm:$0xff] %v1086
        %1151 = vst [vmem:[%s139 + $0x120] sm:$0xff] %v1087
        %1152 = vst [vmem:[%s139 + $0x128] sm:$0xff] %v1088
        %1153 = vst [vmem:[%s139 + $0x130] sm:$0xff] %v1089
        %1154 = vst [vmem:[%s139 + $0x138] sm:$0xff] %v1090
        %1155 = vst [vmem:[%s139 + $0x140] sm:$0xff] %v1091
        %1156 = vst [vmem:[%s139 + $0x148] sm:$0xff] %v1092
        %1157 = vst [vmem:[%s139 + $0x150] sm:$0xff] %v1093
        %1158 = vst [vmem:[%s139 + $0x158] sm:$0xff] %v1094
        %1159 = vst [vmem:[%s139 + $0x160] sm:$0xff] %v1095
        %1160 = vst [vmem:[%s139 + $0x168] sm:$0xff] %v1096
        %1161 = vst [vmem:[%s139 + $0x170] sm:$0xff] %v1097
        %1162 = vst [vmem:[%s139 + $0x178] sm:$0xff] %v1098
        %1163 = vst [vmem:[%s139 + $0x180] sm:$0xff] %v1099
        %1164 = vst [vmem:[%s139 + $0x188] sm:$0xff] %v1100
        %1165 = vst [vmem:[%s139 + $0x190] sm:$0xff] %v1101
        %1166 = vst [vmem:[%s139 + $0x198] sm:$0xff] %v1102
        %1167 = vst [vmem:[%s139 + $0x1a0] sm:$0xff] %v1103
        %1168 = vst [vmem:[%s139 + $0x1a8] sm:$0xff] %v1104
        %1169 = vst [vmem:[%s139 + $0x1b0] sm:$0xff] %v1105
        %1170 = vst [vmem:[%s139 + $0x1b8] sm:$0xff] %v1106
        %1171 = vst [vmem:[%s139 + $0x1c0] sm:$0xff] %v1107
        %1172 = vst [vmem:[%s139 + $0x1c8] sm:$0xff] %v1108
        %1173 = vst [vmem:[%s139 + $0x1d0] sm:$0xff] %v1109
        %1174 = vst [vmem:[%s139 + $0x1d8] sm:$0xff] %v1110
        %1175 = vst [vmem:[%s139 + $0x1e0] sm:$0xff] %v1111
        %1176 = vst [vmem:[%s139 + $0x1e8] sm:$0xff] %v1112
        %1177 = vst [vmem:[%s139 + $0x1f0] sm:$0xff] %v1113
        %1178 = vst [vmem:[%s139 + $0x1f8] sm:$0xff] %v1114
        %s1179 = sand.u32 %s71, 1
        %s1180 = scalar_lea.sflag [#allocation3], %s1179
        %s1181 = sand.u32 %s71, 1
        %s1182 = smul.addr %s1181, 512
        %s1183 = scalar_lea.vmem [#allocation2], %s1182
        // Predicated region
        $region29: #{conv_transpose_leaky.1} parent=27 // pred_check
          %p1184 = pneg %p81
        $region30: #{conv_transpose_leaky.1} parent=27 // pred_check_branch
          %1186 = sbr.rel (%p1184) target = $region32
        $region31: #{conv_transpose_leaky.1} parent=27 // pred_region
          %s1187 = smul.u32 32, %s16
          %s1189 = ssub.s32 8192, 8192
          %1190 = vsyncadd %s1180, %s1189
          %s1191 = smul.addr %s1187, 2
          %s1192 = smul.addr %s1191, 128
          %s1193 = scalar_lea.hbm %s2, %s1192
          %s1194 = sshll.u32 %s1183, 4
          %s1195 = int_to_ptr.vmem [resolvable:$true] %s1194
          %1200 = dma.vmem_to_hbm [thread:$0]  %s1195, 8192, %s1193, %s1180, 256, 256, 16
        $region32: #{conv_transpose_leaky.1} parent=27 // pred_fallthru
          _
      $region28: #{conv_transpose_leaky.1} parent=5 // pred_fallthru
        _
      %p1201 = scmp.le.s32.totalorder 2, %s11
      // Predicated region
      $region33: #{conv_transpose_leaky.1} parent=5 // pred_check
        %p1202 = pneg %p1201
      $region34: #{conv_transpose_leaky.1} parent=5 // pred_check_branch
        %1204 = sbr.rel (%p1202) target = $region36
      $region35: #{conv_transpose_leaky.1} parent=5 // pred_region
        %s1205 = ssub.s32 %s11, 2
        // Predicated region
        $region37: #{conv_transpose_leaky.1} parent=35 // pred_check
          %p1206 = pneg %p87
        $region38: #{conv_transpose_leaky.1} parent=35 // pred_check_branch
          %1208 = sbr.rel (%p1206) target = $region40
        $region39: #{conv_transpose_leaky.1} parent=35 // pred_region
          %s1209 = sand.u32 %s72, 1
          %s1210 = scalar_lea.sflag [#allocation3], %s1209
          %s1211 = sand.u32 %s72, 1
          %s1212 = smul.addr %s1211, 512
          %s1213 = scalar_lea.vmem [#allocation2], %s1212
          %1214 = dma.done %s1210, 8192
        $region40: #{conv_transpose_leaky.1} parent=35 // pred_fallthru
          _
      $region36: #{conv_transpose_leaky.1} parent=5 // pred_fallthru
        _
    $region6: #{conv_transpose_leaky.1} parent=1 // loop_footer
      %s15 = sadd.s32 1, %s11
    $region7: #{conv_transpose_leaky.1} parent=1 // loop_footer_branch
      %10 = sbr.rel target = $region3
    $region8: #{conv_transpose_leaky.1} parent=1 // loop_exit
      _
    %1215 = vsyncpa [#allocation3], 1
    %s1216 = scalar_lea.sflag [#allocation3], 1
    %1217 = vsyncpa %s1216, 1

</llo_original>
